<compile_context>
chip_gen: v6e
topology: v6e:2x2x1
jax: 0.10.0
libtpu: 0.0.40
codegen_flags: <defaults>
</compile_context>

<pallas_src>
import functools

import jax
import jax.numpy as jnp
from jax.experimental import pallas as pl
from jax.experimental.pallas import tpu as pltpu


def _round_up(x, m):
    return (x + m - 1) // m * m


def _vmem_capacity_bytes():
    try:
        info = pltpu.get_tpu_info()
        cap = getattr(info, "vmem_capacity_bytes", None)
        if cap:
            return int(cap)
    except Exception:
        pass
    return 64 * 2**20        # conservative default (v7x per-TensorCore VMEM)


def _plan_tiles(n, vmem_cap):
    """Pick (n_pad, tile_rows, tile_cols).

    Every BlockSpec dim is either a multiple of (8, 128) or the full padded
    extent, and the attention working set stays bounded independent of N.
    """
    if n <= 1024:
        # Small graph: one column tile; split rows in two so the "parallel"
        # row axis can shard across both TensorCores on v7x.
        n_pad = _round_up(n, 16)
        return n_pad, max(8, n_pad // 2), n_pad
    # Large graph: bounded column tiles (online accumulation over columns).
    tile_rows = 512 if vmem_cap > 80 * 2**20 else 256
    budget = int(vmem_cap * 0.5)
    # ~16 bytes per (row, col) tile element: int8 adj (x2 buffers) + f32 temps.
    tile_cols = budget // (16 * tile_rows)
    tile_cols = max(tile_rows, min(2048, tile_cols // tile_rows * tile_rows))
    n_pad = _round_up(n, tile_cols)
    return n_pad, tile_rows, tile_cols


# ----------------------------------------------------------------------------
# Projection kernel: x_aug @ W_pack -> (packed h in bf16, attention scores f32)
# ----------------------------------------------------------------------------
def _proj_kernel(x_ref, w_ref, h_ref, s_ref, *, hp, w_h):
    acc = jnp.dot(x_ref[...], w_ref[...],
                  preferred_element_type=jnp.float32)        # [T, hp + 2H]
    h = acc[:, :hp].astype(jnp.bfloat16)                     # [feat_h | 1] per head
    if w_h > hp:                                             # lane-dense padding
        h = jnp.concatenate(
            [h, jnp.zeros((h.shape[0], w_h - hp), jnp.bfloat16)], axis=-1)
    h_ref[...] = h                                           # single unmasked store
    s_ref[...] = acc[:, hp:]                                 # [T, 2H] src|dst scores


def _project(x_aug, w_pack, *, hp, w_h, tile_rows):
    n_pad, f_aug = x_aug.shape
    cols = w_pack.shape[1]
    kernel = functools.partial(_proj_kernel, hp=hp, w_h=w_h)
    return pl.pallas_call(
        kernel,
        out_shape=(jax.ShapeDtypeStruct((n_pad, w_h), jnp.bfloat16),
                   jax.ShapeDtypeStruct((n_pad, cols - hp), jnp.float32)),
        grid=(n_pad // tile_rows,),
        in_specs=[pl.BlockSpec((tile_rows, f_aug), lambda i: (i, 0)),
                  pl.BlockSpec((f_aug, cols), lambda i: (0, 0))],       # resident
        out_specs=(pl.BlockSpec((tile_rows, w_h), lambda i: (i, 0)),
                   pl.BlockSpec((tile_rows, cols - hp), lambda i: (i, 0))),
        compiler_params=pltpu.CompilerParams(
            dimension_semantics=("parallel",)),
    )(x_aug, w_pack)


# ----------------------------------------------------------------------------
# Attention / aggregation kernel (grid: target-row tiles x source-column tiles)
# ----------------------------------------------------------------------------
def _gat_attn_kernel(adj_ref, h_ref, ssrc_ref, dstm_ref, bias_ref, o_ref,
                     *acc_refs, heads, cpd, concat, apply_relu, out_dim, out_w):
    k = pl.program_id(1)

    @pl.when(k == 0)
    def _():
        for acc in acc_refs:
            acc[...] = jnp.zeros_like(acc)

    mask = adj_ref[...].astype(jnp.float32)                       # [Tr, Tc]
    for hd in range(heads):
        # Edge logits j -> i; the per-row max m was precomputed in the wrapper
        # (LeakyReLU monotonicity), so no cross-lane reduction is needed here.
        e = dstm_ref[:, hd:hd + 1] + ssrc_ref[hd:hd + 1, :]       # [Tr, Tc]
        e = jnp.where(e > 0, e, 0.2 * e)                          # LeakyReLU(0.2)
        m = dstm_ref[:, heads + hd:heads + hd + 1]                # [Tr, 1]
        p = (jnp.exp(e - m) * mask).astype(jnp.bfloat16)          # masked, unnormalized
        # Full-width matmul: the packed "ones" column of h gives the softmax
        # denominator; normalization is deferred to the finalize step.
        acc_refs[hd][...] += jnp.dot(p, h_ref[...],
                                     preferred_element_type=jnp.float32)

    @pl.when(k == pl.num_programs(1) - 1)
    def _():
        outs = []
        for hd in range(heads):
            res = acc_refs[hd][...]                               # [Tr, w_h] f32
            base = hd * (cpd + 1)
            denom = jnp.maximum(res[:, base + cpd:base + cpd + 1],
                                jnp.float32(1e-20))
            inv = pl.reciprocal(denom, approx=True)
            outs.append(res[:, base:base + cpd] * inv)
        if concat:
            out = jnp.concatenate(outs, axis=-1)                  # [Tr, HC]
        else:
            out = outs[0]
            for extra in outs[1:]:
                out = out + extra
            out = out * jnp.float32(1.0 / heads)
        out = out + bias_ref[...]
        if apply_relu:
            out = jnp.maximum(out, 0.0)
        if out_w > out_dim:                                       # lane-dense store
            out = jnp.concatenate(
                [out, jnp.zeros((out.shape[0], out_w - out_dim), out.dtype)],
                axis=-1)
        o_ref[...] = out.astype(o_ref.dtype)


def gat_layer(x, w, att_src, att_dst, bias, adj, *, heads, cpd, concat,
              apply_relu, tile_rows, tile_cols, out_dtype, vmem_cap):
    n_pad = x.shape[0]
    f_w = w.shape[0]
    hc = heads * cpd
    hp = heads * (cpd + 1)

    # --- wrapper-side packing (folds attention projections + denominator
    #     column into the single projection matmul) ---------------------------
    ones_col = jnp.ones((n_pad, 1), x.dtype)
    x_aug = jnp.concatenate([x[:, :f_w], ones_col], axis=-1).astype(jnp.bfloat16)

    w_heads = w.reshape(f_w, heads, cpd)
    w_src = jnp.einsum("fhc,hc->fh", w_heads, att_src)            # [f_w, H]
    w_dst = jnp.einsum("fhc,hc->fh", w_heads, att_dst)            # [f_w, H]
    unit = jnp.zeros((f_w + 1, 1), jnp.float32).at[f_w, 0].set(1.0)
    cols = []
    for hd in range(heads):
        cols.append(jnp.pad(w_heads[:, hd, :], ((0, 1), (0, 0))))  # head features
        cols.append(unit)                                          # denominator col
    cols.append(jnp.pad(jnp.concatenate([w_src, w_dst], axis=-1),
                        ((0, 1), (0, 0))))                         # score columns
    w_pack = jnp.concatenate(cols, axis=-1).astype(jnp.bfloat16)   # [f_w+1, hp+2H]

    w_h = _round_up(hp, 128)
    h_pack, scores = _project(x_aug, w_pack, hp=hp, w_h=w_h, tile_rows=tile_rows)

    s_src = scores[:, :heads]                                      # [N, H]
    s_dst = scores[:, heads:]                                      # [N, H]
    # Row max of the logits, analytic via LeakyReLU monotonicity from the
    # global per-head max of the source scores -> safe upper bound, exp <= 1.
    smax = jnp.max(s_src, axis=0, keepdims=True)                   # [1, H]
    z = s_dst + smax
    m = jnp.where(z > 0, z, 0.2 * z)
    dstm = jnp.concatenate([s_dst, m], axis=-1)                    # [N, 2H]
    s_src_t = s_src.T                                              # [H, N]

    out_dim = hc if concat else cpd
    out_w = _round_up(out_dim, 128)

    # VMEM working-set estimate -> scoped limit with headroom, per-generation
    # capacity aware (v7x 64 MiB vs v5e/v6e 128 MiB).
    ws = (2 * tile_rows * tile_cols                  # adj tiles (int8, dbl-buffered)
          + 4 * tile_rows * tile_cols * 4            # e / exp / p temporaries (f32)
          + 2 * tile_cols * w_h * 2                  # h tiles (bf16)
          + 2 * heads * tile_cols * 4                # s_src tiles
          + heads * tile_rows * w_h * 4              # accumulator scratch
          + 2 * tile_rows * out_w * 4)               # output tiles
    vmem_limit = int(min(0.75 * vmem_cap, max(32 * 2**20, 2 * ws)))

    kernel = functools.partial(_gat_attn_kernel, heads=heads, cpd=cpd,
                               concat=concat, apply_relu=apply_relu,
                               out_dim=out_dim, out_w=out_w)
    return pl.pallas_call(
        kernel,
        out_shape=jax.ShapeDtypeStruct((n_pad, out_w), out_dtype),
        grid=(n_pad // tile_rows, n_pad // tile_cols),
        in_specs=[
            pl.BlockSpec((tile_rows, tile_cols), lambda i, k: (i, k)),   # adj
            pl.BlockSpec((tile_cols, w_h), lambda i, k: (k, 0)),         # h_pack
            pl.BlockSpec((heads, tile_cols), lambda i, k: (0, k)),       # s_src^T
            pl.BlockSpec((tile_rows, 2 * heads), lambda i, k: (i, 0)),   # s_dst | m
            pl.BlockSpec((1, out_dim), lambda i, k: (0, 0)),             # bias
        ],
        out_specs=pl.BlockSpec((tile_rows, out_w), lambda i, k: (i, 0)),
        scratch_shapes=[pltpu.VMEM((tile_rows, w_h), jnp.float32)
                        for _ in range(heads)],
        compiler_params=pltpu.CompilerParams(
            dimension_semantics=("parallel", "arbitrary"),
            vmem_limit_bytes=vmem_limit),
    )(adj, h_pack, s_src_t, dstm, bias)


# ----------------------------------------------------------------------------
# Graph / params / forward
# ----------------------------------------------------------------------------
def make_adjacency(n, n_pad, edge_index):
    """int8 mask: adj[i, j] = 1 iff edge j -> i (PyG src->dst) + self-loops."""
    adj = jnp.zeros((n_pad, n_pad), jnp.int8)
    idx = jnp.arange(n)
    adj = adj.at[idx, idx].set(1)            # self-loops for real nodes only
    if edge_index.shape[1] > 0:
        src = edge_index[0]
        dst = edge_index[1]
        adj = adj.at[dst, src].set(1)
    return adj


def init_params(key, input_dim, hidden_dim, output_dim):
    ks = jax.random.split(key, 8)

    def glorot(k, shape):
        fan_in, fan_out = shape[-2], shape[-1]
        scale = jnp.sqrt(6.0 / (fan_in + fan_out))
        return jax.random.uniform(k, shape, jnp.float32, -scale, scale)

    h2 = hidden_dim * 2  # conv1: heads=2, concat=True
    return {
        # GATConv(input_dim, hidden_dim, heads=2, concat=True)
        "w1": glorot(ks[0], (input_dim, h2)),
        "att_src1": glorot(ks[1], (2, hidden_dim)),
        "att_dst1": glorot(ks[2], (2, hidden_dim)),
        "b1": jnp.zeros((1, h2), jnp.float32),
        # GATConv(hidden_dim * 2, output_dim, heads=1, concat=False)
        "w2": glorot(ks[3], (h2, output_dim)),
        "att_src2": glorot(ks[4], (1, output_dim)),
        "att_dst2": glorot(ks[5], (1, output_dim)),
        "b2": jnp.zeros((1, output_dim), jnp.float32),
    }


def gnn_forward(x, edge_index, params, hidden_dim, output_dim):
    n = x.shape[0]
    vmem_cap = _vmem_capacity_bytes()
    n_pad, tile_rows, tile_cols = _plan_tiles(n, vmem_cap)
    if n_pad != n:
        x = jnp.pad(x, ((0, n_pad - n), (0, 0)))
    adj = make_adjacency(n, n_pad, edge_index)

    # The two layers are separate pallas_calls because layer 2 needs the full
    # layer-1 output (global dependency across row tiles).
    # x = relu(conv1(x, edge_index))   -- emitted bf16, 128-lane padded
    h = gat_layer(x, params["w1"], params["att_src1"], params["att_dst1"],
                  params["b1"], adj, heads=2, cpd=hidden_dim, concat=True,
                  apply_relu=True, tile_rows=tile_rows, tile_cols=tile_cols,
                  out_dtype=jnp.bfloat16, vmem_cap=vmem_cap)
    # return conv2(x, edge_index)
    out = gat_layer(h, params["w2"], params["att_src2"], params["att_dst2"],
                    params["b2"], adj, heads=1, cpd=output_dim, concat=False,
                    apply_relu=False, tile_rows=tile_rows, tile_cols=tile_cols,
                    out_dtype=jnp.float32, vmem_cap=vmem_cap)
    return out[:n, :output_dim]


if __name__ == "__main__":
    N = 8            # nodes
    INPUT_DIM = 16
    HIDDEN_DIM = 8
    OUTPUT_DIM = 4

    key = jax.random.PRNGKey(0)
    k_x, k_p = jax.random.split(key)

    # Synthetic "domain_map" -> fully connected within each group (no self
    # edges), mirroring the edge construction in the reference script.
    domain_map = {0: [0, 1, 2, 3], 1: [4, 5, 6, 7]}
    edges = [(s, d) for nodes in domain_map.values()
             for s in nodes for d in nodes if s != d]
    edge_index = jnp.asarray(edges, dtype=jnp.int32).T   # [2, E], row0=src row1=dst

    x = jax.random.normal(k_x, (N, INPUT_DIM), jnp.float32)
    params = init_params(k_p, INPUT_DIM, HIDDEN_DIM, OUTPUT_DIM)

    out = gnn_forward(x, edge_index, params, HIDDEN_DIM, OUTPUT_DIM)
    out = jax.block_until_ready(out)
    assert out.shape == (N, OUTPUT_DIM)
    assert bool(jnp.all(jnp.isfinite(out)))
    print("KERNEL_OK")
</pallas_src>

<mosaic_0001>
module attributes {stable_mosaic.version = 11 : i64} {
  func.func @_proj_kernel(%arg0: i32, %arg1: memref<8x17xbf16, #tpu.memory_space<vmem>>, %arg2: memref<17x22xbf16, #tpu.memory_space<vmem>>, %arg3: memref<8x128xbf16, #tpu.memory_space<vmem>>, %arg4: memref<8x4xf32, #tpu.memory_space<vmem>>) attributes {dimension_semantics = [#tpu.dimension_semantics<parallel>], iteration_bounds = array<i64: 2>, scalar_prefetch = 0 : i64, scratch_operands = 0 : i64, tpu.core_type = #tpu.core_type<tc>, window_params = [{transform_indices = @transform_0, window_bounds = array<i64: 8, 17>}, {pipeline_mode = #tpu.pipeline_mode<synchronous>, transform_indices = @transform_1, window_bounds = array<i64: 17, 22>}, {transform_indices = @transform_2, window_bounds = array<i64: 8, 128>}, {transform_indices = @transform_3, window_bounds = array<i64: 8, 4>}]} {
    %c0 = arith.constant 0 : index
    %c0_0 = arith.constant 0 : index
    %0 = vector.load %arg1[%c0, %c0_0] : memref<8x17xbf16, #tpu.memory_space<vmem>>, vector<8x17xbf16>
    %c0_1 = arith.constant 0 : index
    %c0_2 = arith.constant 0 : index
    %1 = vector.load %arg2[%c0_1, %c0_2] : memref<17x22xbf16, #tpu.memory_space<vmem>>, vector<17x22xbf16>
    %cst = arith.constant dense<0.000000e+00> : vector<8x22xf32>
    %2 = tpu.matmul %0, %1, %cst {dimension_numbers = #tpu.dot_dimension_numbers<[1], [0], [0], [1], [0, 0, 1, 1], [], []>} : vector<8x17xbf16>, vector<17x22xbf16>, vector<8x22xf32> -> vector<8x22xf32>
    %3 = vector.extract_strided_slice %2 {offsets = [0, 0], sizes = [8, 18], strides = [1, 1]} : vector<8x22xf32> to vector<8x18xf32>
    %4 = arith.truncf %3 : vector<8x18xf32> to vector<8x18xbf16>
    %cst_3 = arith.constant 0.000000e+00 : bf16
    %5 = vector.broadcast %cst_3 : bf16 to vector<8x110xbf16>
    %6 = tpu.concatenate %4, %5 in 1 : vector<8x18xbf16>, vector<8x110xbf16> -> vector<8x128xbf16>
    %c0_4 = arith.constant 0 : index
    %c0_5 = arith.constant 0 : index
    %7 = vector.load %arg3[%c0_4, %c0_5] : memref<8x128xbf16, #tpu.memory_space<vmem>>, vector<8x128xbf16>
    tpu.vector_store %arg3[%c0_4, %c0_5], %6 {strides = array<i32>} : memref<8x128xbf16, #tpu.memory_space<vmem>>, vector<8x128xbf16>,
    %8 = vector.extract_strided_slice %2 {offsets = [0, 18], sizes = [8, 4], strides = [1, 1]} : vector<8x22xf32> to vector<8x4xf32>
    %c0_6 = arith.constant 0 : index
    %c0_7 = arith.constant 0 : index
    %9 = vector.load %arg4[%c0_6, %c0_7] : memref<8x4xf32, #tpu.memory_space<vmem>>, vector<8x4xf32>
    tpu.vector_store %arg4[%c0_6, %c0_7], %8 {strides = array<i32>} : memref<8x4xf32, #tpu.memory_space<vmem>>, vector<8x4xf32>,
    return
  }
  func.func @transform_0(%arg0: i32) -> (i32, i32) {
    %c0_i32 = arith.constant 0 : i32
    %c0_i32_0 = arith.constant 0 : i32
    return %arg0, %c0_i32 : i32, i32
  }
  func.func @transform_1(%arg0: i32) -> (i32, i32) {
    %c0_i32 = arith.constant 0 : i32
    %c0_i32_0 = arith.constant 0 : i32
    %c0_i32_1 = arith.constant 0 : i32
    return %c0_i32, %c0_i32_0 : i32, i32
  }
  func.func @transform_2(%arg0: i32) -> (i32, i32) {
    %c0_i32 = arith.constant 0 : i32
    %c0_i32_0 = arith.constant 0 : i32
    return %arg0, %c0_i32 : i32, i32
  }
  func.func @transform_3(%arg0: i32) -> (i32, i32) {
    %c0_i32 = arith.constant 0 : i32
    %c0_i32_0 = arith.constant 0 : i32
    return %arg0, %c0_i32 : i32, i32
  }
}

</mosaic_0001>

<llo_original>
// kernel: tpu_custom_call.1
$region0: #{tpu_custom_call.1}
  #allocation0 [shape = 'u32[]', space=smem, size = 0x4, offset = 0x4, fixed_abs, tag = 'smem constant byte address 0x4 - core index']
  #allocation1 [shape = 'u32[144,128]{1,0:T(1,128)}', space=vmem, size = 0x12000, scoped, tag = 'internal scratch']
  %s0 = inlined_call_operand.hbm [shape: bf16[16,17], index: 0, kind: input, shape index: {}]
  %s1 = inlined_call_operand.hbm [shape: bf16[17,22], index: 1, kind: input, shape index: {}]
  %s2 = inlined_call_operand.hbm [shape: bf16[16,128], index: 2, kind: output, shape index: {0}]
  %s3 = inlined_call_operand.vmem [shape: f32[16,4], index: 3, kind: output, shape index: {1}]
  %4 = xla_tuple %s2, %s3
  %s5 = sld [smem:[#allocation0]]
  $region57: #{tpu_custom_call.1} parent=0
    _
  %s7 = ssub.s32 1, %s5
  %s8 = scalar_select 0, %s7, %s5
  $region1: #{tpu_custom_call.1} parent=0
    #allocation2 [shape = 'u8[4096]{0}', space=vmem, size = 0x1000, scoped, tag = 'input window, operand 0']
    #allocation3 [shape = 's32[2]{0}', space=sflag, size = 0x8, scoped, tag = 'scoped memory for tpu_custom_call.1']
    #allocation4 [shape = 's32[2]{0}', space=sflag, size = 0x8, scoped, tag = 'scoped memory for tpu_custom_call.1']
    #allocation5 [shape = 'u8[6144]{0}', space=vmem, size = 0x1800, scoped, tag = 'input window, operand 1, single buffered']
    #allocation6 [shape = 's32[1]{0}', space=sflag, size = 0x4, scoped, tag = 'scoped memory for tpu_custom_call.1']
    #allocation7 [shape = 'u8[4096]{0}', space=vmem, size = 0x1000, scoped, tag = 'output window, operand 0']
    %9 = vsyncpa [#allocation3], 0
    %s10 = scalar_lea.sflag [#allocation3], 1
    %11 = vsyncpa %s10, 0
    %12 = vsyncpa [#allocation6], 0
    %13 = vsyncpa [#allocation4], 0
    %s14 = scalar_lea.sflag [#allocation4], 1
    %15 = vsyncpa %s14, 0
    loop: start=0, step=1, limit=4
    $region2: #{tpu_custom_call.1} parent=1 // loop_pre_header
      _
    $region3: #{tpu_custom_call.1} parent=1 // loop_header
      %s17 = sphi 0, %s21
      %p18 = scmp.ge.s32.totalorder %s17, 4
      %s27 = sphi 0, %s29
      %s30 = sphi 0, %s27
      %s31 = sphi 0, %s30
      %s47 = sphi 0, %s31
      %s51 = sphi 0, %s51
      %s53 = sphi 0, %s51
      %s54 = sphi 0, %s53
      %s68 = sphi 0, %s54
      %s74 = sphi 0, %s76
      %s77 = sphi 0, %s74
      %s78 = sphi 0, %s77
      %s94 = sphi 0, %s78
      %s100 = sphi 0, %s102
      %s103 = sphi 0, %s100
      %s104 = sphi 0, %s103
      %s120 = sphi 0, %s104
    $region4: #{tpu_custom_call.1} parent=1 // loop_header_branch
      %20 = sbr.rel (%p18) target = $region8
    $region5: #{tpu_custom_call.1} parent=1 // loop_body
      %s22 = ssub.s32 %s17, 1
      %s23 = ssub.s32 %s17, 2
      %s24 = sadd.s32 %s17, 1
      %s25 = ssub.s32 %s17, %s24
      %p26 = scmp.eq.s32.totalorder %s25, 0
      %s28 = sadd.s32 %s27, 1
      %s29 = scalar_select %p26, %s27, %s28
      %p32 = pneg %p26
      %p33 = scmp.eq.s32.totalorder %s17, 1
      %p34 = por %p32, %p33
      %p35 = scmp.ne.s32.totalorder %s27, %s30
      %p36 = scmp.eq.s32.totalorder %s17, 0
      %p37 = por %p35, %p36
      %p38 = scmp.ne.s32.totalorder %s27, %s30
      %p39 = scmp.eq.s32.totalorder %s22, 1
      %p40 = por %p38, %p39
      %p41 = scmp.ne.s32.totalorder %s30, %s31
      %p42 = scmp.eq.s32.totalorder %s22, 0
      %p43 = por %p41, %p42
      %p44 = scmp.ne.s32.totalorder %s30, %s31
      %p45 = scmp.eq.s32.totalorder %s23, 1
      %p46 = por %p44, %p45
      %p48 = scmp.ne.s32.totalorder %s31, %s47
      %p49 = scmp.eq.s32.totalorder %s23, 0
      %p50 = por %p48, %p49
      %s52 = sadd.s32 %s51, 1
      %p55 = scmp.eq.s32.totalorder %s17, 1
      %p56 = scmp.ne.s32.totalorder %s51, %s53
      %p57 = scmp.eq.s32.totalorder %s17, 0
      %p58 = por %p56, %p57
      %p59 = scmp.ne.s32.totalorder %s51, %s53
      %p60 = scmp.eq.s32.totalorder %s22, 1
      %p61 = por %p59, %p60
      %p62 = scmp.ne.s32.totalorder %s53, %s54
      %p63 = scmp.eq.s32.totalorder %s22, 0
      %p64 = por %p62, %p63
      %p65 = scmp.ne.s32.totalorder %s53, %s54
      %p66 = scmp.eq.s32.totalorder %s23, 1
      %p67 = por %p65, %p66
      %p69 = scmp.ne.s32.totalorder %s54, %s68
      %p70 = scmp.eq.s32.totalorder %s23, 0
      %p71 = por %p69, %p70
      %s72 = ssub.s32 %s17, %s24
      %p73 = scmp.eq.s32.totalorder %s72, 0
      %s75 = sadd.s32 %s74, 1
      %s76 = scalar_select %p73, %s74, %s75
      %p79 = pneg %p73
      %p80 = scmp.eq.s32.totalorder %s17, 1
      %p81 = por %p79, %p80
      %p82 = scmp.ne.s32.totalorder %s74, %s77
      %p83 = scmp.eq.s32.totalorder %s17, 0
      %p84 = por %p82, %p83
      %p85 = scmp.ne.s32.totalorder %s74, %s77
      %p86 = scmp.eq.s32.totalorder %s22, 1
      %p87 = por %p85, %p86
      %p88 = scmp.ne.s32.totalorder %s77, %s78
      %p89 = scmp.eq.s32.totalorder %s22, 0
      %p90 = por %p88, %p89
      %p91 = scmp.ne.s32.totalorder %s77, %s78
      %p92 = scmp.eq.s32.totalorder %s23, 1
      %p93 = por %p91, %p92
      %p95 = scmp.ne.s32.totalorder %s78, %s94
      %p96 = scmp.eq.s32.totalorder %s23, 0
      %p97 = por %p95, %p96
      %s98 = ssub.s32 %s17, %s24
      %p99 = scmp.eq.s32.totalorder %s98, 0
      %s101 = sadd.s32 %s100, 1
      %s102 = scalar_select %p99, %s100, %s101
      %p105 = pneg %p99
      %p106 = scmp.eq.s32.totalorder %s17, 1
      %p107 = por %p105, %p106
      %p108 = scmp.ne.s32.totalorder %s100, %s103
      %p109 = scmp.eq.s32.totalorder %s17, 0
      %p110 = por %p108, %p109
      %p111 = scmp.ne.s32.totalorder %s100, %s103
      %p112 = scmp.eq.s32.totalorder %s22, 1
      %p113 = por %p111, %p112
      %p114 = scmp.ne.s32.totalorder %s103, %s104
      %p115 = scmp.eq.s32.totalorder %s22, 0
      %p116 = por %p114, %p115
      %p117 = scmp.ne.s32.totalorder %s103, %s104
      %p118 = scmp.eq.s32.totalorder %s23, 1
      %p119 = por %p117, %p118
      %p121 = scmp.ne.s32.totalorder %s104, %s120
      %p122 = scmp.eq.s32.totalorder %s23, 0
      %p123 = por %p121, %p122
      %p124 = scmp.le.s32.totalorder 1, %s17
      %p125 = scmp.lt.s32.totalorder %s17, 3
      %p126 = pnand %p124, %p125
      %p127 = pneg %p126
      // Predicated region
      $region9: #{tpu_custom_call.1} parent=5 // pred_check
        _
      $region10: #{tpu_custom_call.1} parent=5 // pred_check_branch
        %129 = sbr.rel (%p126) target = $region12
      $region11: #{tpu_custom_call.1} parent=5 // pred_region
        %s130 = ssub.s32 %s17, 1
        // Predicated region
        $region13: #{tpu_custom_call.1} parent=11 // pred_check
          %p131 = pneg %p64
        $region14: #{tpu_custom_call.1} parent=11 // pred_check_branch
          %133 = sbr.rel (%p131) target = $region16
        $region15: #{tpu_custom_call.1} parent=11 // pred_region
          %s135 = ssub.s32 192, 192
          %136 = vsyncadd [#allocation6], %s135
          %s137 = sshll.u32 [#allocation5], 4
          %s138 = int_to_ptr.vmem [resolvable:$true] %s137
          %143 = dma.hbm_to_vmem [thread:$0]  %s1, 192, %s138, [#allocation6], 64, 64, 4
        $region16: #{tpu_custom_call.1} parent=11 // pred_fallthru
          _
      $region12: #{tpu_custom_call.1} parent=5 // pred_fallthru
        _
      %p144 = scmp.lt.s32.totalorder %s17, 2
      // Predicated region
      $region17: #{tpu_custom_call.1} parent=5 // pred_check
        %p145 = pneg %p144
      $region18: #{tpu_custom_call.1} parent=5 // pred_check_branch
        %147 = sbr.rel (%p145) target = $region20
      $region19: #{tpu_custom_call.1} parent=5 // pred_region
        // Predicated region
        $region21: #{tpu_custom_call.1} parent=19 // pred_check
          %p148 = pneg %p37
        $region22: #{tpu_custom_call.1} parent=19 // pred_check_branch
          %150 = sbr.rel (%p148) target = $region24
        $region23: #{tpu_custom_call.1} parent=19 // pred_region
          %s151 = sand.u32 %s27, 1
          %s152 = scalar_lea.sflag [#allocation3], %s151
          %s153 = sand.u32 %s27, 1
          %s154 = smul.addr %s153, 4
          %s155 = scalar_lea.vmem [#allocation2], %s154
          %s157 = ssub.s32 64, 64
          %158 = vsyncadd %s152, %s157
          %s159 = smul.addr %s17, 64
          %s160 = scalar_lea.hbm %s0, %s159
          %s162 = sshll.u32 %s155, 4
          %s163 = int_to_ptr.vmem [resolvable:$true] %s162
          %165 = dma.hbm_to_vmem [thread:$0]  %s160, 64, %s163, %s152
        $region24: #{tpu_custom_call.1} parent=19 // pred_fallthru
          _
      $region20: #{tpu_custom_call.1} parent=5 // pred_fallthru
        _
      %p166 = scmp.le.s32.totalorder 1, %s17
      %p167 = scmp.lt.s32.totalorder %s17, 3
      %p168 = pnand %p166, %p167
      %p169 = pneg %p168
      // Predicated region
      $region25: #{tpu_custom_call.1} parent=5 // pred_check
        _
      $region26: #{tpu_custom_call.1} parent=5 // pred_check_branch
        %171 = sbr.rel (%p168) target = $region28
      $region27: #{tpu_custom_call.1} parent=5 // pred_region
        %s172 = ssub.s32 %s17, 1
        %s173 = sand.u32 %s30, 1
        %s174 = scalar_lea.sflag [#allocation3], %s173
        %s175 = sand.u32 %s30, 1
        %s176 = smul.addr %s175, 4
        %s177 = scalar_lea.vmem [#allocation2], %s176
        // Predicated region
        $region29: #{tpu_custom_call.1} parent=27 // pred_check
          %p178 = pneg %p43
        $region30: #{tpu_custom_call.1} parent=27 // pred_check_branch
          %180 = sbr.rel (%p178) target = $region32
        $region31: #{tpu_custom_call.1} parent=27 // pred_region
          %181 = dma.done %s174, 64
        $region32: #{tpu_custom_call.1} parent=27 // pred_fallthru
          _
        // Predicated region
        $region33: #{tpu_custom_call.1} parent=27 // pred_check
          %p182 = pneg %p64
        $region34: #{tpu_custom_call.1} parent=27 // pred_check_branch
          %184 = sbr.rel (%p182) target = $region36
        $region35: #{tpu_custom_call.1} parent=27 // pred_region
          %185 = dma.done [#allocation6], 192
        $region36: #{tpu_custom_call.1} parent=27 // pred_fallthru
          _
        %s186 = sand.u32 %s30, 1
        %s187 = scalar_lea.sflag [#allocation3], %s186
        %s188 = sand.u32 %s30, 1
        %s189 = smul.addr %s188, 4
        %s190 = scalar_lea.vmem [#allocation2], %s189
        %p191 = pneg %p43
        %p192 = pneg %p40
        %p193 = pneg %p64
        %p194 = pneg %p61
        %p195 = pneg %p90
        %p196 = pneg %p87
        %s197 = sand.u32 %s77, 1
        %s198 = scalar_lea.sflag [#allocation4], %s197
        %s199 = sand.u32 %s77, 1
        %s200 = smul.addr %s199, 4
        %s201 = scalar_lea.vmem [#allocation7], %s200
        %p202 = pneg %p116
        %p203 = pneg %p113
        %p204 = scmp.lt.s32.totalorder %s22, 1
        %s205 = scalar_select %p204, %s22, 1
        %s206 = smul.addr %s205, 8
        %s207 = scalar_lea.vmem %s3, %s206
        %p208 = scmp.lt.s32.totalorder %s22, 1
        %s209 = scalar_select %p208, %s22, 1
        %s210 = smul.addr %s209, 8
        %s211 = scalar_lea.vmem %s3, %s210
        %v213 = vld [vmem:[%s177] sm:$0xf]
        %v214 = vld [vmem:[#allocation5] sm:$0xf]
        %v215 = vld [vmem:[#allocation5 + $0x4] sm:$0xf]
        %v216 = vld [vmem:[#allocation5 + $0x8] sm:$0x1]
        %v220 = vunpack.c.l.b16 %v214
        %v221 = vunpack.c.l.b16 %v215
        %v222 = vunpack.c.l.b16 %v216
        %v223 = vpack.c.b16 %v221, %v220
        %v224 = vpack.c.b16 %v222, %v222
        %vm226 = vcmask 138240
        %v228 = vsel %vm226, %v213, 0
        %vm230 = vcmask 1040384
        %v231 = vsel 0, 4294967295, 65535
        %v232 = vsel %vm230, %v231, 0
        %v234 = vand.u32 %v224, %v232
        %236 = vmatprep.subr.bf16.mxu0 0
        %237 = vmatpush1.bf16.msra.mxu0 0
        %238 = vmatprep.subr.bf16.mxu0 0
        %239 = vmatpush1.bf16.msra.mxu0 0
        %240 = vmatprep.subr.bf16.mxu0 0
        %241 = vmatpush1.bf16.msra.mxu0 0
        %242 = vmatprep.subr.bf16.mxu0 0
        %243 = vmatpush1.bf16.msra.mxu0 0
        %244 = vmatprep.subr.bf16.mxu0 0
        %245 = vmatpush1.bf16.msra.mxu0 0
        %246 = vmatprep.subr.bf16.mxu0 0
        %247 = vmatpush1.bf16.msra.mxu0 0
        %248 = vmatprep.subr.bf16.mxu0 0
        %249 = vmatpush1.bf16.msra.mxu0 %v234
        %250 = vmatprep.subr.bf16.mxu0 0
        %251 = vmatpush1.bf16.msra.mxu0 %v223
        %252 = vmatprep.subr.bf16.mxu0 0
        %253 = vmatpush2.bf16.msra.mxu0 0
        %254 = vmatprep.subr.bf16.mxu0 0
        %255 = vmatpush2.bf16.msra.mxu0 0
        %256 = vmatprep.subr.bf16.mxu0 0
        %257 = vmatpush2.bf16.msra.mxu0 0
        %258 = vmatprep.subr.bf16.mxu0 0
        %259 = vmatpush2.bf16.msra.mxu0 0
        %260 = vmatprep.subr.bf16.mxu0 0
        %261 = vmatpush2.bf16.msra.mxu0 0
        %262 = vmatprep.subr.bf16.mxu0 0
        %263 = vmatpush2.bf16.msra.mxu0 0
        %264 = vmatprep.subr.bf16.mxu0 0
        %265 = vmatpush2.bf16.msra.mxu0 0
        %266 = vmatprep.subr.bf16.mxu0 0
        %267 = vmatpush2.bf16.msra.mxu0 0
        %268 = vmatprep.mubr.bf16.mxu0 0
        %269 = vmatmul.mubr.bf16.gmra.mxu0 %v228
        %v270 = vpop.f32.mrf.mxu0
        %v271 = vadd.f32 0.0, %v270
        %v272 = vpop.f32.mrf.mxu0
        %v273 = vpop.f32.mrf.mxu0
        %v274 = vpop.f32.mrf.mxu0
        %275 = vdwg.mxu0
        %v276 = vpack.c.bf16 %v271, %v271
        %vm277 = vcmask 146432
        %v280 = vsel %vm277, %v276, 0
        %282 = vst [vmem:[%s201] sm:$0xf] %v280
        %284 = vrot.lane.b32.xlu0 %v271, 110
        %v285 = vpop.permute.xlu0 %284
        %vm287 = vcmask 31744
        %288 = vst.msk [vmem:[%s211] sm:$0xff] %vm287, %v285
        %s289 = sand.u32 %s77, 1
        %s290 = scalar_lea.sflag [#allocation4], %s289
        %s291 = sand.u32 %s77, 1
        %s292 = smul.addr %s291, 4
        %s293 = scalar_lea.vmem [#allocation7], %s292
        %p294 = scmp.lt.s32.totalorder %s22, 1
        %s295 = scalar_select %p294, %s22, 1
        %s296 = smul.addr %s295, 8
        %s297 = scalar_lea.vmem %s3, %s296
        // Predicated region
        $region37: #{tpu_custom_call.1} parent=27 // pred_check
          %p298 = pneg %p87
        $region38: #{tpu_custom_call.1} parent=27 // pred_check_branch
          %300 = sbr.rel (%p298) target = $region40
        $region39: #{tpu_custom_call.1} parent=27 // pred_region
          %s302 = ssub.s32 64, 64
          %303 = vsyncadd %s290, %s302
          %s304 = smul.addr %s22, 64
          %s305 = scalar_lea.hbm %s2, %s304
          %s307 = sshll.u32 %s293, 4
          %s308 = int_to_ptr.vmem [resolvable:$true] %s307
          %310 = dma.vmem_to_hbm [thread:$0]  %s308, 64, %s305, %s290
        $region40: #{tpu_custom_call.1} parent=27 // pred_fallthru
          _
        // Predicated region
        $region41: #{tpu_custom_call.1} parent=27 // pred_check
          %p311 = pneg %p113
        $region42: #{tpu_custom_call.1} parent=27 // pred_check_branch
          %313 = sbr.rel (%p311) target = $region44
        $region43: #{tpu_custom_call.1} parent=27 // pred_region
          _
        $region44: #{tpu_custom_call.1} parent=27 // pred_fallthru
          _
      $region28: #{tpu_custom_call.1} parent=5 // pred_fallthru
        _
      %p314 = scmp.le.s32.totalorder 2, %s17
      // Predicated region
      $region45: #{tpu_custom_call.1} parent=5 // pred_check
        %p315 = pneg %p314
      $region46: #{tpu_custom_call.1} parent=5 // pred_check_branch
        %317 = sbr.rel (%p315) target = $region48
      $region47: #{tpu_custom_call.1} parent=5 // pred_region
        %s318 = ssub.s32 %s17, 2
        // Predicated region
        $region49: #{tpu_custom_call.1} parent=47 // pred_check
          %p319 = pneg %p93
        $region50: #{tpu_custom_call.1} parent=47 // pred_check_branch
          %321 = sbr.rel (%p319) target = $region52
        $region51: #{tpu_custom_call.1} parent=47 // pred_region
          %s322 = sand.u32 %s78, 1
          %s323 = scalar_lea.sflag [#allocation4], %s322
          %s324 = sand.u32 %s78, 1
          %s325 = smul.addr %s324, 4
          %s326 = scalar_lea.vmem [#allocation7], %s325
          %327 = dma.done %s323, 64
        $region52: #{tpu_custom_call.1} parent=47 // pred_fallthru
          _
        // Predicated region
        $region53: #{tpu_custom_call.1} parent=47 // pred_check
          %p328 = pneg %p119
        $region54: #{tpu_custom_call.1} parent=47 // pred_check_branch
          %330 = sbr.rel (%p328) target = $region56
        $region55: #{tpu_custom_call.1} parent=47 // pred_region
          %p331 = scmp.lt.s32.totalorder %s23, 1
          %s332 = scalar_select %p331, %s23, 1
          %s333 = smul.addr %s332, 8
          %s334 = scalar_lea.vmem %s3, %s333
        $region56: #{tpu_custom_call.1} parent=47 // pred_fallthru
          _
      $region48: #{tpu_custom_call.1} parent=5 // pred_fallthru
        _
    $region6: #{tpu_custom_call.1} parent=1 // loop_footer
      %s21 = sadd.s32 1, %s17
    $region7: #{tpu_custom_call.1} parent=1 // loop_footer_branch
      %16 = sbr.rel target = $region3
    $region8: #{tpu_custom_call.1} parent=1 // loop_exit
      _
    %335 = vsyncpa [#allocation3], 1
    %s336 = scalar_lea.sflag [#allocation3], 1
    %337 = vsyncpa %s336, 1
    %338 = vsyncpa [#allocation6], 1
    %339 = vsyncpa [#allocation4], 1
    %s340 = scalar_lea.sflag [#allocation4], 1
    %341 = vsyncpa %s340, 1

</llo_original>
